<compile_context>
chip_gen: v5e
topology: v5e:2x2
jax: 0.10.0
libtpu: 0.0.40
codegen_flags: <defaults>
</compile_context>

<pallas_src>
import functools

import jax
import jax.numpy as jnp
from jax import lax
from jax.experimental import pallas as pl
from jax.experimental.pallas import tpu as pltpu

MAX_WALLS = 20
INPUT_SIZE = 6 + MAX_WALLS * 2   # 46
HIDDEN = 256
N_ACTIONS = 3
OUT_PAD = 8                      # output head padded 3 -> 8 lanes (full last dim)
LN_EPS = 1e-5
LEAKY_SLOPE = 0.01
TM_CAP = 1024                    # rows per grid step at large batch

# Row layout of the packed per-feature vectors operand.
_B1, _G1, _BE1, _B2, _G2, _BE2 = 0, 1, 2, 3, 4, 5


def _round_up(x, m):
    return ((x + m - 1) // m) * m


def _bf16_elementwise_ok():
    # bf16 VALU exists on v6e / v7x; keep the post-LN chain in f32 elsewhere (v5e etc.).
    try:
        kind = jax.devices()[0].device_kind.lower()
    except Exception:
        return False
    return any(tag in kind for tag in ("v6", "v7", "7x"))


def _ln_leaky(h, gamma, beta, elem_dtype):
    # One-pass LayerNorm statistics in f32 (biased variance, clamped at 0, eps=1e-5),
    # then '* gamma + beta' and LeakyReLU in elem_dtype (bf16 on v6e/v7x, f32 on v5e).
    inv_n = 1.0 / h.shape[-1]
    mean = jnp.sum(h, axis=-1, keepdims=True) * inv_n
    meansq = jnp.sum(h * h, axis=-1, keepdims=True) * inv_n
    var = jnp.maximum(meansq - mean * mean, 0.0)
    norm = ((h - mean) * lax.rsqrt(var + LN_EPS)).astype(elem_dtype)
    out = norm * gamma.astype(elem_dtype) + beta.astype(elem_dtype)
    out = jnp.where(out > 0, out, jnp.asarray(LEAKY_SLOPE, elem_dtype) * out)
    return out.astype(jnp.bfloat16)   # bf16 MXU operand for the next matmul


def dqn_kernel(x_ref, w1_ref, vecs_ref, w2_ref, w3_ref, b3_ref, o_ref,
               *, elem_dtype):
    # x arrives as f32 (TM, 46); cast to bf16 in-kernel (no wrapper pad/cast pass).
    x = x_ref[...].astype(jnp.bfloat16)

    b1 = vecs_ref[_B1:_B1 + 1, :]
    g1 = vecs_ref[_G1:_G1 + 1, :]
    be1 = vecs_ref[_BE1:_BE1 + 1, :]
    b2 = vecs_ref[_B2:_B2 + 1, :]
    g2 = vecs_ref[_G2:_G2 + 1, :]
    be2 = vecs_ref[_BE2:_BE2 + 1, :]

    # fc1 -> ln1 -> leaky_relu   (bf16 MXU operands, f32 accumulate)
    h = jnp.dot(x, w1_ref[...], preferred_element_type=jnp.float32) + b1
    h = _ln_leaky(h, g1, be1, elem_dtype)

    # fc2 -> ln2 -> leaky_relu
    h = jnp.dot(h, w2_ref[...], preferred_element_type=jnp.float32) + b2
    h = _ln_leaky(h, g2, be2, elem_dtype)

    # fc3 (output head padded to 8 lanes; f32 store, wrapper slices to 3)
    o_ref[...] = (jnp.dot(h, w3_ref[...], preferred_element_type=jnp.float32)
                  + b3_ref[...])


def _choose_tm(batch):
    if batch <= 128:
        return max(8, _round_up(batch, 8))          # single tile for small batches
    # >= 2 blocks so v7x's dual TensorCores both get work on the parallel axis,
    # <= TM_CAP rows per block to amortize the ~0.35us per-grid-step overhead.
    return min(TM_CAP, _round_up((batch + 1) // 2, 8))


def dqn_forward(x, kp):
    """x: (B, 46) f32.  kp: prepared (packed/padded, bf16-weight) params.  Returns (B, 3) f32."""
    B, F = x.shape
    assert F == INPUT_SIZE
    TM = _choose_tm(B)
    n_blocks = (B + TM - 1) // TM
    B_pad = n_blocks * TM
    if B_pad != B:
        x = jnp.pad(x, ((0, B_pad - B), (0, 0)))     # batch pad only; no feature pad

    def wspec(shape):
        return pl.BlockSpec(shape, lambda i: (0, 0))  # VMEM-resident across the grid

    mm_flops = 2 * B_pad * (INPUT_SIZE * HIDDEN + HIDDEN * HIDDEN + HIDDEN * OUT_PAD)
    w_bytes = ((INPUT_SIZE * HIDDEN + HIDDEN * HIDDEN + HIDDEN * OUT_PAD) * 2
               + (8 * HIDDEN + OUT_PAD) * 4)
    bytes_accessed = B_pad * INPUT_SIZE * 4 + B_pad * OUT_PAD * 4 + w_bytes

    elem_dtype = jnp.bfloat16 if _bf16_elementwise_ok() else jnp.float32

    out = pl.pallas_call(
        functools.partial(dqn_kernel, elem_dtype=elem_dtype),
        out_shape=jax.ShapeDtypeStruct((B_pad, OUT_PAD), jnp.float32),
        grid=(n_blocks,),
        in_specs=[
            pl.BlockSpec((TM, INPUT_SIZE), lambda i: (i, 0)),  # x tile (pipelined)
            wspec((INPUT_SIZE, HIDDEN)),                       # w1 (bf16)
            wspec((8, HIDDEN)),                                # packed b1/g1/be1/b2/g2/be2
            wspec((HIDDEN, HIDDEN)),                           # w2 (bf16)
            wspec((HIDDEN, OUT_PAD)),                          # w3 (bf16, padded 3->8)
            wspec((1, OUT_PAD)),                               # b3 (padded 3->8)
        ],
        out_specs=pl.BlockSpec((TM, OUT_PAD), lambda i: (i, 0)),
        compiler_params=pltpu.CompilerParams(
            dimension_semantics=("parallel",)),
        cost_estimate=pl.CostEstimate(
            flops=mm_flops,
            transcendentals=2 * B_pad,          # two rsqrt per row
            bytes_accessed=bytes_accessed),
    )(x, kp["w1"], kp["vecs"], kp["w2"], kp["w3"], kp["b3"])

    return out[:B, :N_ACTIONS]


def init_params(key):
    # PyTorch nn.Linear default init: U(-1/sqrt(fan_in), +1/sqrt(fan_in)); f32, unpadded.
    ks = jax.random.split(key, 6)

    def lin(kw, kb, fan_in, fan_out):
        bound = 1.0 / jnp.sqrt(fan_in)
        w = jax.random.uniform(kw, (fan_in, fan_out), jnp.float32, -bound, bound)
        b = jax.random.uniform(kb, (1, fan_out), jnp.float32, -bound, bound)
        return w, b

    w1, b1 = lin(ks[0], ks[1], INPUT_SIZE, HIDDEN)
    w2, b2 = lin(ks[2], ks[3], HIDDEN, HIDDEN)
    w3, b3 = lin(ks[4], ks[5], HIDDEN, N_ACTIONS)
    return {
        "w1": w1, "b1": b1,
        "g1": jnp.ones((1, HIDDEN), jnp.float32), "be1": jnp.zeros((1, HIDDEN), jnp.float32),
        "w2": w2, "b2": b2,
        "g2": jnp.ones((1, HIDDEN), jnp.float32), "be2": jnp.zeros((1, HIDDEN), jnp.float32),
        "w3": w3, "b3": b3,
    }


def prepare_kernel_params(p):
    # One-time packing/padding + bf16 weight cast (padding is zero, results unchanged).
    vecs = jnp.zeros((8, HIDDEN), jnp.float32)
    vecs = (vecs.at[_B1].set(p["b1"][0]).at[_G1].set(p["g1"][0]).at[_BE1].set(p["be1"][0])
                .at[_B2].set(p["b2"][0]).at[_G2].set(p["g2"][0]).at[_BE2].set(p["be2"][0]))
    w3p = jnp.zeros((HIDDEN, OUT_PAD), jnp.float32).at[:, :N_ACTIONS].set(p["w3"])
    b3p = jnp.zeros((1, OUT_PAD), jnp.float32).at[:, :N_ACTIONS].set(p["b3"])
    return {
        "w1": p["w1"].astype(jnp.bfloat16),
        "vecs": vecs,
        "w2": p["w2"].astype(jnp.bfloat16),
        "w3": w3p.astype(jnp.bfloat16),
        "b3": b3p,
    }


def dqn_reference(x, p):
    # Pure-JAX reference with matching bf16 matmul operands / f32 accumulation.
    def ln(h, g, b):
        mean = jnp.mean(h, axis=-1, keepdims=True)
        var = jnp.mean((h - mean) ** 2, axis=-1, keepdims=True)
        return (h - mean) * lax.rsqrt(var + LN_EPS) * g + b

    def leaky(h):
        return jnp.where(h > 0, h, LEAKY_SLOPE * h)

    def mm(a, w):
        return jnp.dot(a.astype(jnp.bfloat16), w.astype(jnp.bfloat16),
                       preferred_element_type=jnp.float32)

    h = mm(x, p["w1"]) + p["b1"]
    h = leaky(ln(h, p["g1"], p["be1"]))
    h = mm(h, p["w2"]) + p["b2"]
    h = leaky(ln(h, p["g2"], p["be2"]))
    return mm(h, p["w3"]) + p["b3"]


if __name__ == "__main__":
    key = jax.random.PRNGKey(0)
    kx, kparam = jax.random.split(key)

    B = 8
    x = jax.random.normal(kx, (B, INPUT_SIZE), jnp.float32)
    params = init_params(kparam)
    kernel_params = prepare_kernel_params(params)

    out = dqn_forward(x, kernel_params)
    jax.block_until_ready(out)

    ref = dqn_reference(x, params)
    assert out.shape == (B, N_ACTIONS)
    assert jnp.allclose(out, ref, atol=5e-3, rtol=5e-3), (
        float(jnp.max(jnp.abs(out - ref))))

    print("KERNEL_OK")
</pallas_src>

<mosaic_0001>
module attributes {stable_mosaic.version = 11 : i64} {
  func.func @dqn_kernel(%arg0: i32, %arg1: memref<8x46xf32, #tpu.memory_space<vmem>>, %arg2: memref<46x256xbf16, #tpu.memory_space<vmem>>, %arg3: memref<8x256xf32, #tpu.memory_space<vmem>>, %arg4: memref<256x256xbf16, #tpu.memory_space<vmem>>, %arg5: memref<256x8xbf16, #tpu.memory_space<vmem>>, %arg6: memref<1x8xf32, #tpu.memory_space<vmem>>, %arg7: memref<8x8xf32, #tpu.memory_space<vmem>>) attributes {dimension_semantics = [#tpu.dimension_semantics<parallel>], iteration_bounds = array<i64: 1>, scalar_prefetch = 0 : i64, scratch_operands = 0 : i64, tpu.core_type = #tpu.core_type<tc>, window_params = [{transform_indices = @transform_0, window_bounds = array<i64: 8, 46>}, {pipeline_mode = #tpu.pipeline_mode<synchronous>, transform_indices = @transform_1, window_bounds = array<i64: 46, 256>}, {pipeline_mode = #tpu.pipeline_mode<synchronous>, transform_indices = @transform_2, window_bounds = array<i64: 8, 256>}, {pipeline_mode = #tpu.pipeline_mode<synchronous>, transform_indices = @transform_3, window_bounds = array<i64: 256, 256>}, {pipeline_mode = #tpu.pipeline_mode<synchronous>, transform_indices = @transform_4, window_bounds = array<i64: 256, 8>}, {pipeline_mode = #tpu.pipeline_mode<synchronous>, transform_indices = @transform_5, window_bounds = array<i64: 1, 8>}, {transform_indices = @transform_6, window_bounds = array<i64: 8, 8>}]} {
    %c0 = arith.constant 0 : index
    %c0_0 = arith.constant 0 : index
    %0 = vector.load %arg1[%c0, %c0_0] : memref<8x46xf32, #tpu.memory_space<vmem>>, vector<8x46xf32>
    %1 = arith.truncf %0 : vector<8x46xf32> to vector<8x46xbf16>
    %c0_1 = arith.constant 0 : index
    %c0_2 = arith.constant 0 : index
    %2 = vector.load %arg3[%c0_1, %c0_2] : memref<8x256xf32, #tpu.memory_space<vmem>>, vector<1x256xf32>
    %c1 = arith.constant 1 : index
    %c0_3 = arith.constant 0 : index
    %3 = vector.load %arg3[%c1, %c0_3] : memref<8x256xf32, #tpu.memory_space<vmem>>, vector<1x256xf32>
    %c2 = arith.constant 2 : index
    %c0_4 = arith.constant 0 : index
    %4 = vector.load %arg3[%c2, %c0_4] : memref<8x256xf32, #tpu.memory_space<vmem>>, vector<1x256xf32>
    %c3 = arith.constant 3 : index
    %c0_5 = arith.constant 0 : index
    %5 = vector.load %arg3[%c3, %c0_5] : memref<8x256xf32, #tpu.memory_space<vmem>>, vector<1x256xf32>
    %c4 = arith.constant 4 : index
    %c0_6 = arith.constant 0 : index
    %6 = vector.load %arg3[%c4, %c0_6] : memref<8x256xf32, #tpu.memory_space<vmem>>, vector<1x256xf32>
    %c5 = arith.constant 5 : index
    %c0_7 = arith.constant 0 : index
    %7 = vector.load %arg3[%c5, %c0_7] : memref<8x256xf32, #tpu.memory_space<vmem>>, vector<1x256xf32>
    %c0_8 = arith.constant 0 : index
    %c0_9 = arith.constant 0 : index
    %8 = vector.load %arg2[%c0_8, %c0_9] : memref<46x256xbf16, #tpu.memory_space<vmem>>, vector<46x256xbf16>
    %cst = arith.constant dense<0.000000e+00> : vector<8x256xf32>
    %9 = tpu.matmul %1, %8, %cst {dimension_numbers = #tpu.dot_dimension_numbers<[1], [0], [0], [1], [0, 0, 1, 1], [], []>} : vector<8x46xbf16>, vector<46x256xbf16>, vector<8x256xf32> -> vector<8x256xf32>
    %10 = vector.broadcast %2 : vector<1x256xf32> to vector<8x256xf32>
    %11 = arith.addf %9, %10 : vector<8x256xf32>
    %cst_10 = arith.constant dense<0.000000e+00> : vector<8xf32>
    %12 = vector.multi_reduction <add>, %11, %cst_10 [1] : vector<8x256xf32> to vector<8xf32>
    %13 = vector.shape_cast %12 : vector<8xf32> to vector<8x1xf32>
    %cst_11 = arith.constant 3.906250e-03 : f32
    %14 = vector.broadcast %cst_11 : f32 to vector<8x1xf32>
    %15 = arith.mulf %13, %14 : vector<8x1xf32>
    %16 = arith.mulf %11, %11 : vector<8x256xf32>
    %cst_12 = arith.constant dense<0.000000e+00> : vector<8xf32>
    %17 = vector.multi_reduction <add>, %16, %cst_12 [1] : vector<8x256xf32> to vector<8xf32>
    %18 = vector.shape_cast %17 : vector<8xf32> to vector<8x1xf32>
    %cst_13 = arith.constant 3.906250e-03 : f32
    %19 = vector.broadcast %cst_13 : f32 to vector<8x1xf32>
    %20 = arith.mulf %18, %19 : vector<8x1xf32>
    %21 = arith.mulf %15, %15 : vector<8x1xf32>
    %22 = arith.subf %20, %21 : vector<8x1xf32>
    %cst_14 = arith.constant 0.000000e+00 : f32
    %23 = vector.broadcast %cst_14 : f32 to vector<8x1xf32>
    %24 = arith.maximumf %22, %23 : vector<8x1xf32>
    %25 = vector.broadcast %15 : vector<8x1xf32> to vector<8x256xf32>
    %26 = arith.subf %11, %25 : vector<8x256xf32>
    %cst_15 = arith.constant 9.99999974E-6 : f32
    %27 = vector.broadcast %cst_15 : f32 to vector<8x1xf32>
    %28 = arith.addf %24, %27 : vector<8x1xf32>
    %29 = math.rsqrt %28 : vector<8x1xf32>
    %30 = vector.broadcast %29 : vector<8x1xf32> to vector<8x256xf32>
    %31 = arith.mulf %26, %30 : vector<8x256xf32>
    %32 = vector.broadcast %3 : vector<1x256xf32> to vector<8x256xf32>
    %33 = arith.mulf %31, %32 : vector<8x256xf32>
    %34 = vector.broadcast %4 : vector<1x256xf32> to vector<8x256xf32>
    %35 = arith.addf %33, %34 : vector<8x256xf32>
    %cst_16 = arith.constant 0.000000e+00 : f32
    %36 = vector.broadcast %cst_16 : f32 to vector<8x256xf32>
    %37 = arith.cmpf ogt, %35, %36 : vector<8x256xf32>
    %cst_17 = arith.constant 0.00999999977 : f32
    %38 = vector.broadcast %cst_17 : f32 to vector<8x256xf32>
    %39 = arith.mulf %38, %35 : vector<8x256xf32>
    %40 = arith.select %37, %35, %39 : vector<8x256xi1>, vector<8x256xf32>
    %41 = arith.truncf %40 : vector<8x256xf32> to vector<8x256xbf16>
    %c0_18 = arith.constant 0 : index
    %c0_19 = arith.constant 0 : index
    %42 = vector.load %arg4[%c0_18, %c0_19] : memref<256x256xbf16, #tpu.memory_space<vmem>>, vector<256x256xbf16>
    %cst_20 = arith.constant dense<0.000000e+00> : vector<8x256xf32>
    %43 = tpu.matmul %41, %42, %cst_20 {dimension_numbers = #tpu.dot_dimension_numbers<[1], [0], [0], [1], [0, 0, 1, 1], [], []>} : vector<8x256xbf16>, vector<256x256xbf16>, vector<8x256xf32> -> vector<8x256xf32>
    %44 = vector.broadcast %5 : vector<1x256xf32> to vector<8x256xf32>
    %45 = arith.addf %43, %44 : vector<8x256xf32>
    %cst_21 = arith.constant dense<0.000000e+00> : vector<8xf32>
    %46 = vector.multi_reduction <add>, %45, %cst_21 [1] : vector<8x256xf32> to vector<8xf32>
    %47 = vector.shape_cast %46 : vector<8xf32> to vector<8x1xf32>
    %cst_22 = arith.constant 3.906250e-03 : f32
    %48 = vector.broadcast %cst_22 : f32 to vector<8x1xf32>
    %49 = arith.mulf %47, %48 : vector<8x1xf32>
    %50 = arith.mulf %45, %45 : vector<8x256xf32>
    %cst_23 = arith.constant dense<0.000000e+00> : vector<8xf32>
    %51 = vector.multi_reduction <add>, %50, %cst_23 [1] : vector<8x256xf32> to vector<8xf32>
    %52 = vector.shape_cast %51 : vector<8xf32> to vector<8x1xf32>
    %cst_24 = arith.constant 3.906250e-03 : f32
    %53 = vector.broadcast %cst_24 : f32 to vector<8x1xf32>
    %54 = arith.mulf %52, %53 : vector<8x1xf32>
    %55 = arith.mulf %49, %49 : vector<8x1xf32>
    %56 = arith.subf %54, %55 : vector<8x1xf32>
    %cst_25 = arith.constant 0.000000e+00 : f32
    %57 = vector.broadcast %cst_25 : f32 to vector<8x1xf32>
    %58 = arith.maximumf %56, %57 : vector<8x1xf32>
    %59 = vector.broadcast %49 : vector<8x1xf32> to vector<8x256xf32>
    %60 = arith.subf %45, %59 : vector<8x256xf32>
    %cst_26 = arith.constant 9.99999974E-6 : f32
    %61 = vector.broadcast %cst_26 : f32 to vector<8x1xf32>
    %62 = arith.addf %58, %61 : vector<8x1xf32>
    %63 = math.rsqrt %62 : vector<8x1xf32>
    %64 = vector.broadcast %63 : vector<8x1xf32> to vector<8x256xf32>
    %65 = arith.mulf %60, %64 : vector<8x256xf32>
    %66 = vector.broadcast %6 : vector<1x256xf32> to vector<8x256xf32>
    %67 = arith.mulf %65, %66 : vector<8x256xf32>
    %68 = vector.broadcast %7 : vector<1x256xf32> to vector<8x256xf32>
    %69 = arith.addf %67, %68 : vector<8x256xf32>
    %cst_27 = arith.constant 0.000000e+00 : f32
    %70 = vector.broadcast %cst_27 : f32 to vector<8x256xf32>
    %71 = arith.cmpf ogt, %69, %70 : vector<8x256xf32>
    %cst_28 = arith.constant 0.00999999977 : f32
    %72 = vector.broadcast %cst_28 : f32 to vector<8x256xf32>
    %73 = arith.mulf %72, %69 : vector<8x256xf32>
    %74 = arith.select %71, %69, %73 : vector<8x256xi1>, vector<8x256xf32>
    %75 = arith.truncf %74 : vector<8x256xf32> to vector<8x256xbf16>
    %c0_29 = arith.constant 0 : index
    %c0_30 = arith.constant 0 : index
    %76 = vector.load %arg5[%c0_29, %c0_30] : memref<256x8xbf16, #tpu.memory_space<vmem>>, vector<256x8xbf16>
    %cst_31 = arith.constant dense<0.000000e+00> : vector<8x8xf32>
    %77 = tpu.matmul %75, %76, %cst_31 {dimension_numbers = #tpu.dot_dimension_numbers<[1], [0], [0], [1], [0, 0, 1, 1], [], []>} : vector<8x256xbf16>, vector<256x8xbf16>, vector<8x8xf32> -> vector<8x8xf32>
    %c0_32 = arith.constant 0 : index
    %c0_33 = arith.constant 0 : index
    %78 = vector.load %arg6[%c0_32, %c0_33] : memref<1x8xf32, #tpu.memory_space<vmem>>, vector<1x8xf32>
    %79 = vector.broadcast %78 : vector<1x8xf32> to vector<8x8xf32>
    %80 = arith.addf %77, %79 : vector<8x8xf32>
    %c0_34 = arith.constant 0 : index
    %c0_35 = arith.constant 0 : index
    %81 = vector.load %arg7[%c0_34, %c0_35] : memref<8x8xf32, #tpu.memory_space<vmem>>, vector<8x8xf32>
    tpu.vector_store %arg7[%c0_34, %c0_35], %80 {strides = array<i32>} : memref<8x8xf32, #tpu.memory_space<vmem>>, vector<8x8xf32>,
    return
  }
  func.func @transform_0(%arg0: i32) -> (i32, i32) {
    %c0_i32 = arith.constant 0 : i32
    %c0_i32_0 = arith.constant 0 : i32
    return %arg0, %c0_i32 : i32, i32
  }
  func.func @transform_1(%arg0: i32) -> (i32, i32) {
    %c0_i32 = arith.constant 0 : i32
    %c0_i32_0 = arith.constant 0 : i32
    %c0_i32_1 = arith.constant 0 : i32
    return %c0_i32, %c0_i32_0 : i32, i32
  }
  func.func @transform_2(%arg0: i32) -> (i32, i32) {
    %c0_i32 = arith.constant 0 : i32
    %c0_i32_0 = arith.constant 0 : i32
    %c0_i32_1 = arith.constant 0 : i32
    return %c0_i32, %c0_i32_0 : i32, i32
  }
  func.func @transform_3(%arg0: i32) -> (i32, i32) {
    %c0_i32 = arith.constant 0 : i32
    %c0_i32_0 = arith.constant 0 : i32
    %c0_i32_1 = arith.constant 0 : i32
    return %c0_i32, %c0_i32_0 : i32, i32
  }
  func.func @transform_4(%arg0: i32) -> (i32, i32) {
    %c0_i32 = arith.constant 0 : i32
    %c0_i32_0 = arith.constant 0 : i32
    %c0_i32_1 = arith.constant 0 : i32
    return %c0_i32, %c0_i32_0 : i32, i32
  }
  func.func @transform_5(%arg0: i32) -> (i32, i32) {
    %c0_i32 = arith.constant 0 : i32
    %c0_i32_0 = arith.constant 0 : i32
    %c0_i32_1 = arith.constant 0 : i32
    return %c0_i32, %c0_i32_0 : i32, i32
  }
  func.func @transform_6(%arg0: i32) -> (i32, i32) {
    %c0_i32 = arith.constant 0 : i32
    %c0_i32_0 = arith.constant 0 : i32
    return %arg0, %c0_i32 : i32, i32
  }
}

</mosaic_0001>

<llo_original>
// kernel: tpu_custom_call.1
$region0: #{tpu_custom_call.1}
  #allocation0 [shape = 'u32[]', space=smem, size = 0x4, offset = 0x4, fixed_abs, tag = 'smem constant byte address 0x4 - core index']
  #allocation1 [shape = 'u32[72,128]{1,0:T(1,128)}', space=vmem, size = 0x9000, scoped, tag = 'internal scratch']
  %s0 = inlined_call_operand.vmem [shape: f32[8,46], index: 0, kind: input, shape index: {}]
  %s1 = inlined_call_operand.vmem [shape: bf16[46,256], index: 1, kind: input, shape index: {}]
  %s2 = inlined_call_operand.vmem [shape: f32[8,256], index: 2, kind: input, shape index: {}]
  %s3 = inlined_call_operand.hbm [shape: bf16[256,256], index: 3, kind: input, shape index: {}]
  %s4 = inlined_call_operand.vmem [shape: bf16[256,8], index: 4, kind: input, shape index: {}]
  %s5 = inlined_call_operand.vmem [shape: f32[1,8], index: 5, kind: input, shape index: {}]
  %s6 = inlined_call_operand.hbm [shape: f32[8,8], index: 6, kind: output, shape index: {}]
  %s7 = sld [smem:[#allocation0]]
  $region38: #{tpu_custom_call.1} parent=0
    _
  %s9 = ssub.s32 1, %s7
  %s10 = scalar_select 0, %s9, %s7
  $region1: #{tpu_custom_call.1} parent=0
    #allocation2 [shape = 'u8[131072]{0}', space=vmem, size = 0x20000, scoped, tag = 'input window, operand 3, single buffered']
    #allocation3 [shape = 's32[1]{0}', space=sflag, size = 0x4, scoped, tag = 'scoped memory for tpu_custom_call.1']
    #allocation4 [shape = 's32[1]{0}', space=sflag, size = 0x4, scoped, tag = 'scoped memory for tpu_custom_call.1']
    #allocation5 [shape = 'u8[4096]{0}', space=vmem, size = 0x1000, scoped, tag = 'output window, operand 0, single buffered']
    %11 = vsyncpa [#allocation3], 0
    %12 = vsyncpa [#allocation4], 0
    // Predicated region
    $region2: #{tpu_custom_call.1} parent=1 // pred_check
      _
    $region3: #{tpu_custom_call.1} parent=1 // pred_check_branch
      %14 = sbr.rel (0) target = $region5
    $region4: #{tpu_custom_call.1} parent=1 // pred_region
      _
    $region5: #{tpu_custom_call.1} parent=1 // pred_fallthru
      _
    // Predicated region
    $region6: #{tpu_custom_call.1} parent=1 // pred_check
      _
    $region7: #{tpu_custom_call.1} parent=1 // pred_check_branch
      %16 = sbr.rel (0) target = $region9
    $region8: #{tpu_custom_call.1} parent=1 // pred_region
      _
    $region9: #{tpu_custom_call.1} parent=1 // pred_fallthru
      _
    // Predicated region
    $region10: #{tpu_custom_call.1} parent=1 // pred_check
      _
    $region11: #{tpu_custom_call.1} parent=1 // pred_check_branch
      %18 = sbr.rel (0) target = $region13
    $region12: #{tpu_custom_call.1} parent=1 // pred_region
      _
    $region13: #{tpu_custom_call.1} parent=1 // pred_fallthru
      _
    // Predicated region
    $region14: #{tpu_custom_call.1} parent=1 // pred_check
      _
    $region15: #{tpu_custom_call.1} parent=1 // pred_check_branch
      %20 = sbr.rel (0) target = $region17
    $region16: #{tpu_custom_call.1} parent=1 // pred_region
      %22 = vsyncadd [#allocation3], 0
      %s23 = sshll.u32 %s3, 4
      %s24 = int_to_ptr.hbm [resolvable:$true] %s23
      %s25 = sshll.u32 [#allocation2], 4
      %s26 = int_to_ptr.vmem [resolvable:$true] %s25
      %31 = dma.hbm_to_vmem [thread:$0]  %s24, 4096, %s26, [#allocation3], 128, 128, 8
    $region17: #{tpu_custom_call.1} parent=1 // pred_fallthru
      _
    // Predicated region
    $region18: #{tpu_custom_call.1} parent=1 // pred_check
      _
    $region19: #{tpu_custom_call.1} parent=1 // pred_check_branch
      %33 = sbr.rel (0) target = $region21
    $region20: #{tpu_custom_call.1} parent=1 // pred_region
      _
    $region21: #{tpu_custom_call.1} parent=1 // pred_fallthru
      _
    // Predicated region
    $region22: #{tpu_custom_call.1} parent=1 // pred_check
      _
    $region23: #{tpu_custom_call.1} parent=1 // pred_check_branch
      %35 = sbr.rel (0) target = $region25
    $region24: #{tpu_custom_call.1} parent=1 // pred_region
      _
    $region25: #{tpu_custom_call.1} parent=1 // pred_fallthru
      _
    // Predicated region
    $region26: #{tpu_custom_call.1} parent=1 // pred_check
      _
    $region27: #{tpu_custom_call.1} parent=1 // pred_check_branch
      %37 = sbr.rel (0) target = $region29
    $region28: #{tpu_custom_call.1} parent=1 // pred_region
      %39 = dma.done [#allocation3], 4096
    $region29: #{tpu_custom_call.1} parent=1 // pred_fallthru
      _
    %v41 = vld [vmem:[%s0] sm:$0xff]
    %v42 = vpack.c.bf16 %v41, %v41
    %v43 = vld [vmem:[%s2] ss:$8 sm:$0x3]
    %s44 = scalar_lea.vmem %s2, 1
    %v45 = vld [vmem:[%s44] ss:$8 sm:$0x3]
    %s46 = scalar_lea.vmem %s2, 2
    %v47 = vld [vmem:[%s46] ss:$8 sm:$0x3]
    %s48 = scalar_lea.vmem %s2, 3
    %v49 = vld [vmem:[%s48] ss:$8 sm:$0x3]
    %s50 = scalar_lea.vmem %s2, 4
    %v51 = vld [vmem:[%s50] ss:$8 sm:$0x3]
    %s52 = scalar_lea.vmem %s2, 5
    %v53 = vld [vmem:[%s52] ss:$8 sm:$0x3]
    %v54 = vld [vmem:[%s1] sm:$0xff]
    %v55 = vld [vmem:[%s1 + $0x8] sm:$0xff]
    %v56 = vld [vmem:[%s1 + $0x10] sm:$0xff]
    %v57 = vld [vmem:[%s1 + $0x18] sm:$0xff]
    %v58 = vld [vmem:[%s1 + $0x20] sm:$0xff]
    %v59 = vld [vmem:[%s1 + $0x28] sm:$0x77]
    %v61 = vperm.slane %v43, 0
    %v62 = vperm.slane %v43, 1
    %v71 = vunpack.c.l.b16 %v54
    %v72 = vunpack.c.h.b16 %v54
    %v73 = vunpack.c.l.b16 %v55
    %v74 = vunpack.c.h.b16 %v55
    %v75 = vunpack.c.l.b16 %v56
    %v76 = vunpack.c.h.b16 %v56
    %v77 = vunpack.c.l.b16 %v57
    %v78 = vunpack.c.h.b16 %v57
    %v79 = vunpack.c.l.b16 %v58
    %v80 = vunpack.c.h.b16 %v58
    %v81 = vunpack.c.l.b16 %v59
    %v82 = vunpack.c.h.b16 %v59
    %v83 = vpack.c.b16 %v73, %v71
    %v84 = vpack.c.b16 %v74, %v72
    %v85 = vpack.c.b16 %v77, %v75
    %v86 = vpack.c.b16 %v78, %v76
    %v87 = vpack.c.b16 %v81, %v79
    %v88 = vpack.c.b16 %v82, %v80
    %vm93 = vcmask 375808
    %v95 = vsel %vm93, %v42, 0
    %vm97 = vcmask 1046528
    %v99 = vsel %vm97, %v87, 0
    %v102 = vsel %vm97, %v88, 0
    %104 = vmatpush.bf16.msra.mxu0 0
    %105 = vmatpush.bf16.msra.mxu0 0
    %106 = vmatpush.bf16.msra.mxu0 0
    %107 = vmatpush.bf16.msra.mxu0 0
    %108 = vmatpush.bf16.msra.mxu0 0
    %109 = vmatpush.bf16.msra.mxu0 %v99
    %110 = vmatpush.bf16.msra.mxu0 %v85
    %111 = vmatpush.bf16.msra.mxu0 %v83
    %112 = vmatmul.bf16.gmra.mxu0 %v95
    %v113 = vpop.f32.mrf.mxu0
    %v114 = vadd.f32 %v61, %v113
    %v115 = vpop.f32.mrf.mxu0
    %116 = vdwg.mxu0
    %117 = vmatpush.bf16.msra.mxu0 0
    %118 = vmatpush.bf16.msra.mxu0 0
    %119 = vmatpush.bf16.msra.mxu0 0
    %120 = vmatpush.bf16.msra.mxu0 0
    %121 = vmatpush.bf16.msra.mxu0 0
    %122 = vmatpush.bf16.msra.mxu0 %v102
    %123 = vmatpush.bf16.msra.mxu0 %v86
    %124 = vmatpush.bf16.msra.mxu0 %v84
    %125 = vmatmul.bf16.gmra.mxu0 %v95
    %v126 = vpop.f32.mrf.mxu0
    %v127 = vadd.f32 %v62, %v126
    %v128 = vpop.f32.mrf.mxu0
    %129 = vdwg.mxu0
    %v130 = vadd.f32 %v114, %v127
    %131 = vadd.xlane.f32.xlu0 %v130
    %v132 = vpop.xlane.xlu0 %131
    %v133 = vmul.f32 %v132, 0.00390625
    %v134 = vmul.f32 %v114, %v114
    %v135 = vmul.f32 %v127, %v127
    %v136 = vadd.f32 %v134, %v135
    %137 = vadd.xlane.f32.xlu0 %v136
    %v138 = vpop.xlane.xlu0 %137
    %v139 = vmul.f32 %v138, 0.00390625
    %v140 = vmul.f32 %v133, %v133
    %v141 = vsub.f32 %v139, %v140
    %v142 = vmax.f32 %v141, 0.0
    %v143 = vsub.f32 %v114, %v133
    %v144 = vsub.f32 %v127, %v133
    %v145 = vadd.f32 %v142, 1e-05
    %v146 = vrsqrt.pop %v145
    %v147 = vmul.f32 %v146, %v145
    %v148 = vmul.f32 %v147, %v146
    %v149 = vmul.f32 0.5, %v148
    %v150 = vsub.f32 1.5, %v149
    %v151 = vmul.f32 %v146, %v150
    %vm152 = vweird.f32 %v145
    %vm153 = vweird.f32 %v146
    %vm154 = vmor %vm152, %vm153
    %v155 = vsel %vm154, %v146, %v151
    %v156 = vmul.f32 %v143, %v155
    %v157 = vmul.f32 %v144, %v155
    %v159 = vperm.slane %v45, 0
    %v160 = vperm.slane %v45, 1
    %v163 = vmul.f32 %v156, %v159
    %v164 = vmul.f32 %v157, %v160
    %v166 = vperm.slane %v47, 0
    %v167 = vperm.slane %v47, 1
    %v170 = vadd.f32 %v163, %v166
    %v171 = vadd.f32 %v164, %v167
    %vm172 = vcmp.gt.f32.partialorder %v170, 0.0
    %vm173 = vcmp.gt.f32.partialorder %v171, 0.0
    %v174 = vmul.f32 %v170, 0.01
    %v175 = vmul.f32 %v171, 0.01
    %v176 = vsel %vm172, %v170, %v174
    %v177 = vsel %vm173, %v171, %v175
    %v178 = vpack.c.bf16 %v176, %v176
    %v179 = vpack.c.bf16 %v177, %v177
    %v180 = vld [vmem:[#allocation2] sm:$0xff]
    %v181 = vld [vmem:[#allocation2 + $0x8] sm:$0xff]
    %v182 = vld [vmem:[#allocation2 + $0x10] sm:$0xff]
    %v183 = vld [vmem:[#allocation2 + $0x18] sm:$0xff]
    %v184 = vld [vmem:[#allocation2 + $0x20] sm:$0xff]
    %v185 = vld [vmem:[#allocation2 + $0x28] sm:$0xff]
    %v186 = vld [vmem:[#allocation2 + $0x30] sm:$0xff]
    %v187 = vld [vmem:[#allocation2 + $0x38] sm:$0xff]
    %v188 = vld [vmem:[#allocation2 + $0x40] sm:$0xff]
    %v189 = vld [vmem:[#allocation2 + $0x48] sm:$0xff]
    %v190 = vld [vmem:[#allocation2 + $0x50] sm:$0xff]
    %v191 = vld [vmem:[#allocation2 + $0x58] sm:$0xff]
    %v192 = vld [vmem:[#allocation2 + $0x60] sm:$0xff]
    %v193 = vld [vmem:[#allocation2 + $0x68] sm:$0xff]
    %v194 = vld [vmem:[#allocation2 + $0x70] sm:$0xff]
    %v195 = vld [vmem:[#allocation2 + $0x78] sm:$0xff]
    %v196 = vld [vmem:[#allocation2 + $0x80] sm:$0xff]
    %v197 = vld [vmem:[#allocation2 + $0x88] sm:$0xff]
    %v198 = vld [vmem:[#allocation2 + $0x90] sm:$0xff]
    %v199 = vld [vmem:[#allocation2 + $0x98] sm:$0xff]
    %v200 = vld [vmem:[#allocation2 + $0xa0] sm:$0xff]
    %v201 = vld [vmem:[#allocation2 + $0xa8] sm:$0xff]
    %v202 = vld [vmem:[#allocation2 + $0xb0] sm:$0xff]
    %v203 = vld [vmem:[#allocation2 + $0xb8] sm:$0xff]
    %v204 = vld [vmem:[#allocation2 + $0xc0] sm:$0xff]
    %v205 = vld [vmem:[#allocation2 + $0xc8] sm:$0xff]
    %v206 = vld [vmem:[#allocation2 + $0xd0] sm:$0xff]
    %v207 = vld [vmem:[#allocation2 + $0xd8] sm:$0xff]
    %v208 = vld [vmem:[#allocation2 + $0xe0] sm:$0xff]
    %v209 = vld [vmem:[#allocation2 + $0xe8] sm:$0xff]
    %v210 = vld [vmem:[#allocation2 + $0xf0] sm:$0xff]
    %v211 = vld [vmem:[#allocation2 + $0xf8] sm:$0xff]
    %v213 = vperm.slane %v49, 0
    %v214 = vperm.slane %v49, 1
    %v249 = vunpack.c.l.b16 %v180
    %v250 = vunpack.c.h.b16 %v180
    %v251 = vunpack.c.l.b16 %v181
    %v252 = vunpack.c.h.b16 %v181
    %v253 = vunpack.c.l.b16 %v182
    %v254 = vunpack.c.h.b16 %v182
    %v255 = vunpack.c.l.b16 %v183
    %v256 = vunpack.c.h.b16 %v183
    %v257 = vunpack.c.l.b16 %v184
    %v258 = vunpack.c.h.b16 %v184
    %v259 = vunpack.c.l.b16 %v185
    %v260 = vunpack.c.h.b16 %v185
    %v261 = vunpack.c.l.b16 %v186
    %v262 = vunpack.c.h.b16 %v186
    %v263 = vunpack.c.l.b16 %v187
    %v264 = vunpack.c.h.b16 %v187
    %v265 = vunpack.c.l.b16 %v188
    %v266 = vunpack.c.h.b16 %v188
    %v267 = vunpack.c.l.b16 %v189
    %v268 = vunpack.c.h.b16 %v189
    %v269 = vunpack.c.l.b16 %v190
    %v270 = vunpack.c.h.b16 %v190
    %v271 = vunpack.c.l.b16 %v191
    %v272 = vunpack.c.h.b16 %v191
    %v273 = vunpack.c.l.b16 %v192
    %v274 = vunpack.c.h.b16 %v192
    %v275 = vunpack.c.l.b16 %v193
    %v276 = vunpack.c.h.b16 %v193
    %v277 = vunpack.c.l.b16 %v194
    %v278 = vunpack.c.h.b16 %v194
    %v279 = vunpack.c.l.b16 %v195
    %v280 = vunpack.c.h.b16 %v195
    %v281 = vunpack.c.l.b16 %v196
    %v282 = vunpack.c.h.b16 %v196
    %v283 = vunpack.c.l.b16 %v197
    %v284 = vunpack.c.h.b16 %v197
    %v285 = vunpack.c.l.b16 %v198
    %v286 = vunpack.c.h.b16 %v198
    %v287 = vunpack.c.l.b16 %v199
    %v288 = vunpack.c.h.b16 %v199
    %v289 = vunpack.c.l.b16 %v200
    %v290 = vunpack.c.h.b16 %v200
    %v291 = vunpack.c.l.b16 %v201
    %v292 = vunpack.c.h.b16 %v201
    %v293 = vunpack.c.l.b16 %v202
    %v294 = vunpack.c.h.b16 %v202
    %v295 = vunpack.c.l.b16 %v203
    %v296 = vunpack.c.h.b16 %v203
    %v297 = vunpack.c.l.b16 %v204
    %v298 = vunpack.c.h.b16 %v204
    %v299 = vunpack.c.l.b16 %v205
    %v300 = vunpack.c.h.b16 %v205
    %v301 = vunpack.c.l.b16 %v206
    %v302 = vunpack.c.h.b16 %v206
    %v303 = vunpack.c.l.b16 %v207
    %v304 = vunpack.c.h.b16 %v207
    %v305 = vunpack.c.l.b16 %v208
    %v306 = vunpack.c.h.b16 %v208
    %v307 = vunpack.c.l.b16 %v209
    %v308 = vunpack.c.h.b16 %v209
    %v309 = vunpack.c.l.b16 %v210
    %v310 = vunpack.c.h.b16 %v210
    %v311 = vunpack.c.l.b16 %v211
    %v312 = vunpack.c.h.b16 %v211
    %v313 = vpack.c.b16 %v251, %v249
    %v314 = vpack.c.b16 %v252, %v250
    %v315 = vpack.c.b16 %v255, %v253
    %v316 = vpack.c.b16 %v256, %v254
    %v317 = vpack.c.b16 %v259, %v257
    %v318 = vpack.c.b16 %v260, %v258
    %v319 = vpack.c.b16 %v263, %v261
    %v320 = vpack.c.b16 %v264, %v262
    %v321 = vpack.c.b16 %v267, %v265
    %v322 = vpack.c.b16 %v268, %v266
    %v323 = vpack.c.b16 %v271, %v269
    %v324 = vpack.c.b16 %v272, %v270
    %v325 = vpack.c.b16 %v275, %v273
    %v326 = vpack.c.b16 %v276, %v274
    %v327 = vpack.c.b16 %v279, %v277
    %v328 = vpack.c.b16 %v280, %v278
    %v329 = vpack.c.b16 %v283, %v281
    %v330 = vpack.c.b16 %v284, %v282
    %v331 = vpack.c.b16 %v287, %v285
    %v332 = vpack.c.b16 %v288, %v286
    %v333 = vpack.c.b16 %v291, %v289
    %v334 = vpack.c.b16 %v292, %v290
    %v335 = vpack.c.b16 %v295, %v293
    %v336 = vpack.c.b16 %v296, %v294
    %v337 = vpack.c.b16 %v299, %v297
    %v338 = vpack.c.b16 %v300, %v298
    %v339 = vpack.c.b16 %v303, %v301
    %v340 = vpack.c.b16 %v304, %v302
    %v341 = vpack.c.b16 %v307, %v305
    %v342 = vpack.c.b16 %v308, %v306
    %v343 = vpack.c.b16 %v311, %v309
    %v344 = vpack.c.b16 %v312, %v310
    %377 = vmatpush.bf16.msra.mxu0 %v327
    %378 = vmatpush.bf16.msra.mxu0 %v325
    %379 = vmatpush.bf16.msra.mxu0 %v323
    %380 = vmatpush.bf16.msra.mxu0 %v321
    %381 = vmatpush.bf16.msra.mxu0 %v319
    %382 = vmatpush.bf16.msra.mxu0 %v317
    %383 = vmatpush.bf16.msra.mxu0 %v315
    %384 = vmatpush.bf16.msra.mxu0 %v313
    %385 = vmatmul.bf16.gmra.mxu0 %v178
    %v386 = vpop.f32.mrf.mxu0
    %v387 = vadd.f32 %v213, %v386
    %v388 = vpop.f32.mrf.mxu0
    %389 = vdwg.mxu0
    %390 = vmatpush.bf16.msra.mxu0 %v343
    %391 = vmatpush.bf16.msra.mxu0 %v341
    %392 = vmatpush.bf16.msra.mxu0 %v339
    %393 = vmatpush.bf16.msra.mxu0 %v337
    %394 = vmatpush.bf16.msra.mxu0 %v335
    %395 = vmatpush.bf16.msra.mxu0 %v333
    %396 = vmatpush.bf16.msra.mxu0 %v331
    %397 = vmatpush.bf16.msra.mxu0 %v329
    %398 = vmatmul.bf16.gmra.mxu0 %v179
    %v399 = vpop.f32.mrf.mxu0
    %v400 = vadd.f32 %v387, %v399
    %v401 = vpop.f32.mrf.mxu0
    %402 = vdwg.mxu0
    %403 = vmatpush.bf16.msra.mxu0 %v328
    %404 = vmatpush.bf16.msra.mxu0 %v326
    %405 = vmatpush.bf16.msra.mxu0 %v324
    %406 = vmatpush.bf16.msra.mxu0 %v322
    %407 = vmatpush.bf16.msra.mxu0 %v320
    %408 = vmatpush.bf16.msra.mxu0 %v318
    %409 = vmatpush.bf16.msra.mxu0 %v316
    %410 = vmatpush.bf16.msra.mxu0 %v314
    %411 = vmatmul.bf16.gmra.mxu0 %v178
    %v412 = vpop.f32.mrf.mxu0
    %v413 = vadd.f32 %v214, %v412
    %v414 = vpop.f32.mrf.mxu0
    %415 = vdwg.mxu0
    %416 = vmatpush.bf16.msra.mxu0 %v344
    %417 = vmatpush.bf16.msra.mxu0 %v342
    %418 = vmatpush.bf16.msra.mxu0 %v340
    %419 = vmatpush.bf16.msra.mxu0 %v338
    %420 = vmatpush.bf16.msra.mxu0 %v336
    %421 = vmatpush.bf16.msra.mxu0 %v334
    %422 = vmatpush.bf16.msra.mxu0 %v332
    %423 = vmatpush.bf16.msra.mxu0 %v330
    %424 = vmatmul.bf16.gmra.mxu0 %v179
    %v425 = vpop.f32.mrf.mxu0
    %v426 = vadd.f32 %v413, %v425
    %v427 = vpop.f32.mrf.mxu0
    %428 = vdwg.mxu0
    %v429 = vadd.f32 %v400, %v426
    %430 = vadd.xlane.f32.xlu0 %v429
    %v431 = vpop.xlane.xlu0 %430
    %v432 = vmul.f32 %v431, 0.00390625
    %v433 = vmul.f32 %v400, %v400
    %v434 = vmul.f32 %v426, %v426
    %v435 = vadd.f32 %v433, %v434
    %436 = vadd.xlane.f32.xlu0 %v435
    %v437 = vpop.xlane.xlu0 %436
    %v438 = vmul.f32 %v437, 0.00390625
    %v439 = vmul.f32 %v432, %v432
    %v440 = vsub.f32 %v438, %v439
    %v441 = vmax.f32 %v440, 0.0
    %v442 = vsub.f32 %v400, %v432
    %v443 = vsub.f32 %v426, %v432
    %v444 = vadd.f32 %v441, 1e-05
    %v445 = vrsqrt.pop %v444
    %v446 = vmul.f32 %v445, %v444
    %v447 = vmul.f32 %v446, %v445
    %v448 = vmul.f32 0.5, %v447
    %v449 = vsub.f32 1.5, %v448
    %v450 = vmul.f32 %v445, %v449
    %vm451 = vweird.f32 %v444
    %vm452 = vweird.f32 %v445
    %vm453 = vmor %vm451, %vm452
    %v454 = vsel %vm453, %v445, %v450
    %v455 = vmul.f32 %v442, %v454
    %v456 = vmul.f32 %v443, %v454
    %v458 = vperm.slane %v51, 0
    %v459 = vperm.slane %v51, 1
    %v462 = vmul.f32 %v455, %v458
    %v463 = vmul.f32 %v456, %v459
    %v465 = vperm.slane %v53, 0
    %v466 = vperm.slane %v53, 1
    %v469 = vadd.f32 %v462, %v465
    %v470 = vadd.f32 %v463, %v466
    %vm471 = vcmp.gt.f32.partialorder %v469, 0.0
    %vm472 = vcmp.gt.f32.partialorder %v470, 0.0
    %v473 = vmul.f32 %v469, 0.01
    %v474 = vmul.f32 %v470, 0.01
    %v475 = vsel %vm471, %v469, %v473
    %v476 = vsel %vm472, %v470, %v474
    %v477 = vpack.c.bf16 %v475, %v475
    %v478 = vpack.c.bf16 %v476, %v476
    %v479 = vld [vmem:[%s4] sm:$0xf]
    %v480 = vld [vmem:[%s4 + $0x4] sm:$0xf]
    %v481 = vld [vmem:[%s4 + $0x8] sm:$0xf]
    %v482 = vld [vmem:[%s4 + $0xc] sm:$0xf]
    %v483 = vld [vmem:[%s4 + $0x10] sm:$0xf]
    %v484 = vld [vmem:[%s4 + $0x14] sm:$0xf]
    %v485 = vld [vmem:[%s4 + $0x18] sm:$0xf]
    %v486 = vld [vmem:[%s4 + $0x1c] sm:$0xf]
    %v487 = vld [vmem:[%s4 + $0x20] sm:$0xf]
    %v488 = vld [vmem:[%s4 + $0x24] sm:$0xf]
    %v489 = vld [vmem:[%s4 + $0x28] sm:$0xf]
    %v490 = vld [vmem:[%s4 + $0x2c] sm:$0xf]
    %v491 = vld [vmem:[%s4 + $0x30] sm:$0xf]
    %v492 = vld [vmem:[%s4 + $0x34] sm:$0xf]
    %v493 = vld [vmem:[%s4 + $0x38] sm:$0xf]
    %v494 = vld [vmem:[%s4 + $0x3c] sm:$0xf]
    %v495 = vld [vmem:[%s4 + $0x40] sm:$0xf]
    %v496 = vld [vmem:[%s4 + $0x44] sm:$0xf]
    %v497 = vld [vmem:[%s4 + $0x48] sm:$0xf]
    %v498 = vld [vmem:[%s4 + $0x4c] sm:$0xf]
    %v499 = vld [vmem:[%s4 + $0x50] sm:$0xf]
    %v500 = vld [vmem:[%s4 + $0x54] sm:$0xf]
    %v501 = vld [vmem:[%s4 + $0x58] sm:$0xf]
    %v502 = vld [vmem:[%s4 + $0x5c] sm:$0xf]
    %v503 = vld [vmem:[%s4 + $0x60] sm:$0xf]
    %v504 = vld [vmem:[%s4 + $0x64] sm:$0xf]
    %v505 = vld [vmem:[%s4 + $0x68] sm:$0xf]
    %v506 = vld [vmem:[%s4 + $0x6c] sm:$0xf]
    %v507 = vld [vmem:[%s4 + $0x70] sm:$0xf]
    %v508 = vld [vmem:[%s4 + $0x74] sm:$0xf]
    %v509 = vld [vmem:[%s4 + $0x78] sm:$0xf]
    %v510 = vld [vmem:[%s4 + $0x7c] sm:$0xf]
    %v511 = vld [vmem:[%s5] sm:$0x1]
    %v513 = vperm.slane %v511, 0
    %v547 = vunpack.c.l.b16 %v479
    %v548 = vunpack.c.l.b16 %v480
    %v549 = vunpack.c.l.b16 %v481
    %v550 = vunpack.c.l.b16 %v482
    %v551 = vunpack.c.l.b16 %v483
    %v552 = vunpack.c.l.b16 %v484
    %v553 = vunpack.c.l.b16 %v485
    %v554 = vunpack.c.l.b16 %v486
    %v555 = vunpack.c.l.b16 %v487
    %v556 = vunpack.c.l.b16 %v488
    %v557 = vunpack.c.l.b16 %v489
    %v558 = vunpack.c.l.b16 %v490
    %v559 = vunpack.c.l.b16 %v491
    %v560 = vunpack.c.l.b16 %v492
    %v561 = vunpack.c.l.b16 %v493
    %v562 = vunpack.c.l.b16 %v494
    %v563 = vunpack.c.l.b16 %v495
    %v564 = vunpack.c.l.b16 %v496
    %v565 = vunpack.c.l.b16 %v497
    %v566 = vunpack.c.l.b16 %v498
    %v567 = vunpack.c.l.b16 %v499
    %v568 = vunpack.c.l.b16 %v500
    %v569 = vunpack.c.l.b16 %v501
    %v570 = vunpack.c.l.b16 %v502
    %v571 = vunpack.c.l.b16 %v503
    %v572 = vunpack.c.l.b16 %v504
    %v573 = vunpack.c.l.b16 %v505
    %v574 = vunpack.c.l.b16 %v506
    %v575 = vunpack.c.l.b16 %v507
    %v576 = vunpack.c.l.b16 %v508
    %v577 = vunpack.c.l.b16 %v509
    %v578 = vunpack.c.l.b16 %v510
    %v579 = vpack.c.b16 %v548, %v547
    %v580 = vpack.c.b16 %v550, %v549
    %v581 = vpack.c.b16 %v552, %v551
    %v582 = vpack.c.b16 %v554, %v553
    %v583 = vpack.c.b16 %v556, %v555
    %v584 = vpack.c.b16 %v558, %v557
    %v585 = vpack.c.b16 %v560, %v559
    %v586 = vpack.c.b16 %v562, %v561
    %v587 = vpack.c.b16 %v564, %v563
    %v588 = vpack.c.b16 %v566, %v565
    %v589 = vpack.c.b16 %v568, %v567
    %v590 = vpack.c.b16 %v570, %v569
    %v591 = vpack.c.b16 %v572, %v571
    %v592 = vpack.c.b16 %v574, %v573
    %v593 = vpack.c.b16 %v576, %v575
    %v594 = vpack.c.b16 %v578, %v577
    %611 = vmatpush.bf16.msra.mxu0 %v586
    %612 = vmatpush.bf16.msra.mxu0 %v585
    %613 = vmatpush.bf16.msra.mxu0 %v584
    %614 = vmatpush.bf16.msra.mxu0 %v583
    %615 = vmatpush.bf16.msra.mxu0 %v582
    %616 = vmatpush.bf16.msra.mxu0 %v581
    %617 = vmatpush.bf16.msra.mxu0 %v580
    %618 = vmatpush.bf16.msra.mxu0 %v579
    %619 = vmatmul.bf16.gmra.mxu0 %v477
    %v620 = vpop.f32.mrf.mxu0
    %v621 = vadd.f32 %v513, %v620
    %v622 = vpop.f32.mrf.mxu0
    %623 = vdwg.mxu0
    %624 = vmatpush.bf16.msra.mxu0 %v594
    %625 = vmatpush.bf16.msra.mxu0 %v593
    %626 = vmatpush.bf16.msra.mxu0 %v592
    %627 = vmatpush.bf16.msra.mxu0 %v591
    %628 = vmatpush.bf16.msra.mxu0 %v590
    %629 = vmatpush.bf16.msra.mxu0 %v589
    %630 = vmatpush.bf16.msra.mxu0 %v588
    %631 = vmatpush.bf16.msra.mxu0 %v587
    %632 = vmatmul.bf16.gmra.mxu0 %v478
    %v633 = vpop.f32.mrf.mxu0
    %v634 = vadd.f32 %v621, %v633
    %v635 = vpop.f32.mrf.mxu0
    %636 = vdwg.mxu0
    %vm637 = vcmask 64512
    %638 = vst.msk [vmem:[#allocation5] sm:$0xff] %vm637, %v634
    // Predicated region
    $region30: #{tpu_custom_call.1} parent=1 // pred_check
      _
    $region31: #{tpu_custom_call.1} parent=1 // pred_check_branch
      %640 = sbr.rel (0) target = $region33
    $region32: #{tpu_custom_call.1} parent=1 // pred_region
      %642 = vsyncadd [#allocation4], 0
      %s644 = sshll.u32 [#allocation5], 4
      %s645 = int_to_ptr.vmem [resolvable:$true] %s644
      %s646 = sshll.u32 %s6, 4
      %s647 = int_to_ptr.hbm [resolvable:$true] %s646
      %649 = dma.vmem_to_hbm [thread:$0]  %s645, 128, %s647, [#allocation4]
    $region33: #{tpu_custom_call.1} parent=1 // pred_fallthru
      _
    // Predicated region
    $region34: #{tpu_custom_call.1} parent=1 // pred_check
      _
    $region35: #{tpu_custom_call.1} parent=1 // pred_check_branch
      %651 = sbr.rel (0) target = $region37
    $region36: #{tpu_custom_call.1} parent=1 // pred_region
      %653 = dma.done [#allocation4], 128
    $region37: #{tpu_custom_call.1} parent=1 // pred_fallthru
      _
    %654 = vsyncpa [#allocation3], 1
    %655 = vsyncpa [#allocation4], 1

</llo_original>
